<compile_context>
chip_gen: v7x
topology: tpu7x:2x2x1
jax: 0.10.0
libtpu: 0.0.40
codegen_flags: <defaults>
</compile_context>

<pallas_src>
import functools

import numpy as np
import jax
import jax.numpy as jnp
from jax.experimental import pallas as pl
from jax.experimental.pallas import tpu as pltpu


def _round_up(x: int, m: int) -> int:
    return ((x + m - 1) // m) * m


def _cdiv(a: int, b: int) -> int:
    return (a + b - 1) // b


def _pool_matrix(in_size: int, out_size: int) -> np.ndarray:
    """1-D adaptive-average-pool operator M (out_size, in_size): y = M @ x."""
    m = np.zeros((out_size, in_size), dtype=np.float64)
    for oi in range(out_size):
        start = (oi * in_size) // out_size
        end = -((-(oi + 1) * in_size) // out_size)  # ceil((oi+1)*in/out)
        m[oi, start:end] = 1.0 / (end - start)
    return m


def _resolve(output_size, h: int, w: int):
    if isinstance(output_size, int):
        return output_size, output_size
    oh = h if output_size[0] is None else output_size[0]
    ow = w if output_size[1] is None else output_size[1]
    return oh, ow


def _fused_pool_kernel(x_ref, p_ref, o_ref):
    # x_ref: (TM, H*W)   batch tile of flattened images
    # p_ref: (H*W, OUTp) fused pooling operator (VMEM-resident across grid steps)
    # o_ref: (TM, OUTp)  lane-dense output slab
    o_ref[...] = jnp.dot(
        x_ref[...], p_ref[...], preferred_element_type=jnp.float32
    ).astype(o_ref.dtype)


@functools.lru_cache(maxsize=None)
def _build_fused_pool(n, c, h, w, dtype_name, output_sizes):
    """Build (once per shape/dtype/sizes) a jitted forward for the fused pools."""
    nc, k = n * c, h * w
    np_dtype = np.dtype(dtype_name)

    sizes = [_resolve(os_, h, w) for os_ in output_sizes]
    mats = [np.kron(_pool_matrix(h, oh), _pool_matrix(w, ow)) for oh, ow in sizes]
    # TODO(synk): for very large H*W, switch to a separable (pool-W then pool-H)
    # formulation with a K-tiled accumulator; the dense kron operator is only the
    # right choice while K*OUT_pad stays comfortably inside VMEM (true here: K=169).
    pool_sizes = [m.shape[0] for m in mats]
    out_total = sum(pool_sizes)
    out_pad = max(128, _round_up(out_total, 128))

    p_np = np.zeros((k, out_pad), dtype=np.float64)
    col = 0
    for m in mats:
        p_np[:, col:col + m.shape[0]] = m.T
        col += m.shape[0]
    p_np = p_np.astype(np_dtype)  # baked as a jit constant below (no per-call upload)

    # --- batch-tile selection; no host-side padding copy of X -----------------
    TM_CAP = 1024
    min_tiles = 2 if nc >= 16 else 1            # v7x: give both TensorCores a tile
    n_tiles = max(min_tiles, _cdiv(nc, TM_CAP))
    tm = _round_up(_cdiv(nc, n_tiles), 8)
    if tm >= 256:
        tm = _round_up(tm, 128)                 # fill MXU rows once the batch is large
    grid_m = _cdiv(nc, tm)
    out_rows = grid_m * tm                      # only the (tiny) output is row-padded

    itemsize = np_dtype.itemsize
    cost = pl.CostEstimate(
        flops=2 * out_rows * k * out_pad,
        transcendentals=0,
        bytes_accessed=itemsize * (nc * k + k * out_pad + out_rows * out_pad),
    )

    def fwd(x):
        x_flat = x.reshape(nc, k)
        p = jnp.asarray(p_np)                   # constant under jit, matches x.dtype
        out_all = pl.pallas_call(
            _fused_pool_kernel,
            out_shape=jax.ShapeDtypeStruct((out_rows, out_pad), x.dtype),
            grid_spec=pltpu.PrefetchScalarGridSpec(
                num_scalar_prefetch=0,
                grid=(grid_m,),
                in_specs=[
                    # Batch tile; the final partial block over-reads past nc — those
                    # rows only produce output rows discarded by the [:nc] slice.
                    pl.BlockSpec((tm, k), lambda i: (i, 0)),
                    # Fused pooling operator; constant index_map => stays resident.
                    pl.BlockSpec((k, out_pad), lambda i: (0, 0)),
                ],
                out_specs=pl.BlockSpec((tm, out_pad), lambda i: (i, 0)),
            ),
            compiler_params=pltpu.CompilerParams(
                dimension_semantics=("parallel",),  # shard batch tiles across TCs
            ),
            cost_estimate=cost,
        )(x_flat, p)

        # Slice the fused lane-dense slab back into the four pooled outputs.
        outs = []
        col = 0
        for (oh, ow), sz in zip(sizes, pool_sizes):
            outs.append(out_all[:nc, col:col + sz].reshape(n, c, oh, ow))
            col += sz
        return tuple(outs)

    return jax.jit(fwd)


def fused_adaptive_avg_pool2d(x: jnp.ndarray, output_sizes):
    n, c, h, w = x.shape
    fn = _build_fused_pool(n, c, h, w, str(x.dtype), tuple(output_sizes))
    return fn(x)


def model_forward(x: jnp.ndarray):
    """Equivalent of Model.forward: four adaptive average pools on the same input."""
    return fused_adaptive_avg_pool2d(x, ((6, 5), 1, (None, 3), (3, None)))


def _reference_adaptive_pool_np(x_np: np.ndarray, output_size, h: int, w: int):
    """Host float64 reference (matches PyTorch AdaptiveAvgPool2d semantics)."""
    oh, ow = _resolve(output_size, h, w)
    lh = _pool_matrix(h, oh)
    rw = _pool_matrix(w, ow)
    return np.einsum("ph,nchw,qw->ncpq", lh, x_np.astype(np.float64), rw)


if __name__ == "__main__":
    key = jax.random.PRNGKey(0)
    # Small shape consistent with the module; non-divisible spatial dims (13)
    # exercise the uneven-bin adaptive pooling semantics of all four pools.
    x = jax.random.uniform(key, (2, 4, 13, 13), dtype=jnp.float32)

    outs = jax.block_until_ready(model_forward(x))
    # Second call: hits the cached jitted function (no operator rebuild / recompile).
    outs = jax.block_until_ready(model_forward(x))

    x_np = np.asarray(x)
    specs = [(6, 5), 1, (None, 3), (3, None)]
    expected_shapes = [(2, 4, 6, 5), (2, 4, 1, 1), (2, 4, 13, 3), (2, 4, 3, 13)]
    for o, spec, shp in zip(outs, specs, expected_shapes):
        assert o.shape == shp, (o.shape, shp)
        ref = _reference_adaptive_pool_np(x_np, spec, 13, 13)
        np.testing.assert_allclose(np.asarray(o), ref, rtol=1e-4, atol=1e-5)

    print("KERNEL_OK")
</pallas_src>

<mosaic_0001>
module attributes {stable_mosaic.version = 11 : i64} {
  func.func @_fused_pool_kernel(%arg0: i32, %arg1: memref<8x169xf32, #tpu.memory_space<vmem>>, %arg2: memref<169x128xf32, #tpu.memory_space<vmem>>, %arg3: memref<8x128xf32, #tpu.memory_space<vmem>>) attributes {dimension_semantics = [#tpu.dimension_semantics<parallel>], iteration_bounds = array<i64: 1>, scalar_prefetch = 0 : i64, scratch_operands = 0 : i64, tpu.core_type = #tpu.core_type<tc>, window_params = [{transform_indices = @transform_0, window_bounds = array<i64: 8, 169>}, {pipeline_mode = #tpu.pipeline_mode<synchronous>, transform_indices = @transform_1, window_bounds = array<i64: 169, 128>}, {transform_indices = @transform_2, window_bounds = array<i64: 8, 128>}]} {
    %c0 = arith.constant 0 : index
    %c0_0 = arith.constant 0 : index
    %0 = vector.load %arg1[%c0, %c0_0] : memref<8x169xf32, #tpu.memory_space<vmem>>, vector<8x169xf32>
    %c0_1 = arith.constant 0 : index
    %c0_2 = arith.constant 0 : index
    %1 = vector.load %arg2[%c0_1, %c0_2] : memref<169x128xf32, #tpu.memory_space<vmem>>, vector<169x128xf32>
    %cst = arith.constant dense<0.000000e+00> : vector<8x128xf32>
    %2 = tpu.matmul %0, %1, %cst {dimension_numbers = #tpu.dot_dimension_numbers<[1], [0], [0], [1], [0, 0, 1, 1], [], []>} : vector<8x169xf32>, vector<169x128xf32>, vector<8x128xf32> -> vector<8x128xf32>
    %c0_3 = arith.constant 0 : index
    %c0_4 = arith.constant 0 : index
    %3 = vector.load %arg3[%c0_3, %c0_4] : memref<8x128xf32, #tpu.memory_space<vmem>>, vector<8x128xf32>
    tpu.vector_store %arg3[%c0_3, %c0_4], %2 {strides = array<i32>} : memref<8x128xf32, #tpu.memory_space<vmem>>, vector<8x128xf32>,
    return
  }
  func.func @transform_0(%arg0: i32) -> (i32, i32) {
    %c0_i32 = arith.constant 0 : i32
    %c0_i32_0 = arith.constant 0 : i32
    return %arg0, %c0_i32 : i32, i32
  }
  func.func @transform_1(%arg0: i32) -> (i32, i32) {
    %c0_i32 = arith.constant 0 : i32
    %c0_i32_0 = arith.constant 0 : i32
    %c0_i32_1 = arith.constant 0 : i32
    return %c0_i32, %c0_i32_0 : i32, i32
  }
  func.func @transform_2(%arg0: i32) -> (i32, i32) {
    %c0_i32 = arith.constant 0 : i32
    %c0_i32_0 = arith.constant 0 : i32
    return %arg0, %c0_i32 : i32, i32
  }
}

</mosaic_0001>

<llo_original>
// kernel: fwd.1
$region0: #{fwd.1}
  #allocation0 [shape = 'u32[]', space=smem, size = 0x4, offset = 0x4, fixed_abs, tag = 'smem constant byte address 0x4 - core index']
  #allocation1 [shape = 'u32[144,128]{1,0:T(1,128)}', space=vmem, size = 0x12000, scoped, tag = 'internal scratch']
  %s0 = inlined_call_operand.vmem [shape: f32[8,169], index: 0, kind: input, shape index: {}]
  %s1 = inlined_call_operand.vmem [shape: f32[169,128], index: 1, kind: input, shape index: {}]
  %s2 = inlined_call_operand.vmem [shape: f32[8,128], index: 2, kind: output, shape index: {}]
  %s3 = sld [smem:[#allocation0]]
  $region18: #{fwd.1} parent=0
    _
  %s5 = ssub.s32 1, %s3
  %s6 = scalar_select 0, %s5, %s3
  // Predicated region
  $region2: #{fwd.1} parent=0 // pred_check
    _
  $region3: #{fwd.1} parent=0 // pred_check_branch
    %8 = sbr.rel (0) target = $region5
  $region4: #{fwd.1} parent=0 // pred_region
    _
  $region5: #{fwd.1} parent=0 // pred_fallthru
    _
  // Predicated region
  $region6: #{fwd.1} parent=0 // pred_check
    _
  $region7: #{fwd.1} parent=0 // pred_check_branch
    %10 = sbr.rel (0) target = $region9
  $region8: #{fwd.1} parent=0 // pred_region
    _
  $region9: #{fwd.1} parent=0 // pred_fallthru
    _
  %v11 = vld [vmem:[%s0] sm:$0xff]
  %v12 = vld [vmem:[%s0 + $0x8] sm:$0xff]
  %v13 = vld [vmem:[%s1] sm:$0xff]
  %v14 = vld [vmem:[%s1 + $0x8] sm:$0xff]
  %v15 = vld [vmem:[%s1 + $0x10] sm:$0xff]
  %v16 = vld [vmem:[%s1 + $0x18] sm:$0xff]
  %v17 = vld [vmem:[%s1 + $0x20] sm:$0xff]
  %v18 = vld [vmem:[%s1 + $0x28] sm:$0xff]
  %v19 = vld [vmem:[%s1 + $0x30] sm:$0xff]
  %v20 = vld [vmem:[%s1 + $0x38] sm:$0xff]
  %v21 = vld [vmem:[%s1 + $0x40] sm:$0xff]
  %v22 = vld [vmem:[%s1 + $0x48] sm:$0xff]
  %v23 = vld [vmem:[%s1 + $0x50] sm:$0xff]
  %v24 = vld [vmem:[%s1 + $0x58] sm:$0xff]
  %v25 = vld [vmem:[%s1 + $0x60] sm:$0xff]
  %v26 = vld [vmem:[%s1 + $0x68] sm:$0xff]
  %v27 = vld [vmem:[%s1 + $0x70] sm:$0xff]
  %v28 = vld [vmem:[%s1 + $0x78] sm:$0xff]
  %v29 = vld [vmem:[%s1 + $0x80] sm:$0xff]
  %v30 = vld [vmem:[%s1 + $0x88] sm:$0xff]
  %v31 = vld [vmem:[%s1 + $0x90] sm:$0xff]
  %v32 = vld [vmem:[%s1 + $0x98] sm:$0xff]
  %v33 = vld [vmem:[%s1 + $0xa0] sm:$0xff]
  %v34 = vld [vmem:[%s1 + $0xa8] sm:$0x1]
  %vm35 = vcmask 334848
  %v37 = vsel %vm35, %v12, 0
  %vm39 = vcmask 1040384
  %v41 = vsel %vm39, %v34, 0
  %43 = vmatprep.subr.mxu0 0.0
  %44 = vmatpush1.msra.mxu0 %v13
  %45 = vmatprep.subr.mxu0 0.0
  %46 = vmatpush1.msra.mxu0 %v14
  %47 = vmatprep.subr.mxu0 0.0
  %48 = vmatpush1.msra.mxu0 %v15
  %49 = vmatprep.subr.mxu0 0.0
  %50 = vmatpush1.msra.mxu0 %v16
  %51 = vmatprep.subr.mxu0 0.0
  %52 = vmatpush1.msra.mxu0 %v17
  %53 = vmatprep.subr.mxu0 0.0
  %54 = vmatpush1.msra.mxu0 %v18
  %55 = vmatprep.subr.mxu0 0.0
  %56 = vmatpush1.msra.mxu0 %v19
  %57 = vmatprep.subr.mxu0 0.0
  %58 = vmatpush1.msra.mxu0 %v20
  %59 = vmatprep.subr.mxu0 0.0
  %60 = vmatpush1.msra.mxu0 %v21
  %61 = vmatprep.subr.mxu0 0.0
  %62 = vmatpush1.msra.mxu0 %v22
  %63 = vmatprep.subr.mxu0 0.0
  %64 = vmatpush1.msra.mxu0 %v23
  %65 = vmatprep.subr.mxu0 0.0
  %66 = vmatpush1.msra.mxu0 %v24
  %67 = vmatprep.subr.mxu0 0.0
  %68 = vmatpush1.msra.mxu0 %v25
  %69 = vmatprep.subr.mxu0 0.0
  %70 = vmatpush1.msra.mxu0 %v26
  %71 = vmatprep.subr.mxu0 0.0
  %72 = vmatpush1.msra.mxu0 %v27
  %73 = vmatprep.subr.mxu0 0.0
  %74 = vmatpush1.msra.mxu0 %v28
  %75 = vmatprep.subr.mxu0 0.0
  %76 = vmatpush1.msra.mxu0 %v29
  %77 = vmatprep.subr.mxu0 0.0
  %78 = vmatpush1.msra.mxu0 %v30
  %79 = vmatprep.subr.mxu0 0.0
  %80 = vmatpush1.msra.mxu0 %v31
  %81 = vmatprep.subr.mxu0 0.0
  %82 = vmatpush1.msra.mxu0 %v32
  %83 = vmatprep.subr.mxu0 0.0
  %84 = vmatpush1.msra.mxu0 %v33
  %85 = vmatprep.subr.mxu0 0.0
  %86 = vmatpush1.msra.mxu0 %v41
  %87 = vmatprep.subr.mxu0 0.0
  %88 = vmatpush1.msra.mxu0 0.0
  %89 = vmatprep.subr.mxu0 0.0
  %90 = vmatpush1.msra.mxu0 0.0
  %91 = vmatprep.subr.mxu0 0.0
  %92 = vmatpush1.msra.mxu0 0.0
  %93 = vmatprep.subr.mxu0 0.0
  %94 = vmatpush1.msra.mxu0 0.0
  %95 = vmatprep.subr.mxu0 0.0
  %96 = vmatpush1.msra.mxu0 0.0
  %97 = vmatprep.subr.mxu0 0.0
  %98 = vmatpush1.msra.mxu0 0.0
  %99 = vmatprep.subr.mxu0 0.0
  %100 = vmatpush1.msra.mxu0 0.0
  %101 = vmatprep.subr.mxu0 0.0
  %102 = vmatpush1.msra.mxu0 0.0
  %103 = vmatprep.subr.mxu0 0.0
  %104 = vmatpush1.msra.mxu0 0.0
  %105 = vmatprep.subr.mxu0 0.0
  %106 = vmatpush1.msra.mxu0 0.0
  %107 = vmatprep.mubr.f32.mxu0 %v37
  %108 = vmatmul.mubr.f32.gmra.mrb[0].mxu0 %v11
  %v109 = vpop.f32.mrb[0].mxu0
  %v110 = vadd.f32 0.0, %v109
  %v111 = vpop.f32.mrb[0].mxu0
  %112 = vdwg.mxu0
  %113 = vst [vmem:[%s2] sm:$0xff] %v110
  // Predicated region
  $region10: #{fwd.1} parent=0 // pred_check
    _
  $region11: #{fwd.1} parent=0 // pred_check_branch
    %115 = sbr.rel (0) target = $region13
  $region12: #{fwd.1} parent=0 // pred_region
    _
  $region13: #{fwd.1} parent=0 // pred_fallthru
    _
  // Predicated region
  $region14: #{fwd.1} parent=0 // pred_check
    _
  $region15: #{fwd.1} parent=0 // pred_check_branch
    %117 = sbr.rel (0) target = $region17
  $region16: #{fwd.1} parent=0 // pred_region
    _
  $region17: #{fwd.1} parent=0 // pred_fallthru
    _

</llo_original>
